<compile_context>
chip_gen: v7x
topology: tpu7x:2x2x1
jax: 0.10.0
libtpu: 0.0.40
codegen_flags: <defaults>
</compile_context>

<pallas_src>
from functools import partial

import numpy as np
import jax
import jax.numpy as jnp
from jax.experimental import pallas as pl
from jax.experimental.pallas import tpu as pltpu


# ----------------------------------------------------------------------------
# Real Clebsch-Gordan coefficients (deterministic numpy constants, exactly
# following ClebschGordanReal._add; the complex (1,1,L) CG arrays are the
# standard Condon-Shortley values).
# ----------------------------------------------------------------------------
def _real2complex(L):
    result = np.zeros((2 * L + 1, 2 * L + 1), dtype=np.complex128)
    i_sqrt_2 = 1.0 / np.sqrt(2)
    for m in range(-L, L + 1):
        if m < 0:
            result[L - m, L + m] = i_sqrt_2 * 1j * (-1) ** m
            result[L + m, L + m] = -i_sqrt_2 * 1j
        if m == 0:
            result[L, L] = 1.0
        if m > 0:
            result[L + m, L + m] = i_sqrt_2 * (-1) ** m
            result[L - m, L + m] = i_sqrt_2
    return result


def _complex_cg_1_1(L):
    c = np.zeros((3, 3, 2 * L + 1), dtype=np.double)
    s2, s3, s6 = 1.0 / np.sqrt(2), 1.0 / np.sqrt(3), 1.0 / np.sqrt(6)
    if L == 0:
        c[0, 2, 0] = s3
        c[1, 1, 0] = -s3
        c[2, 0, 0] = s3
    elif L == 1:
        c[2, 1, 2] = s2
        c[1, 2, 2] = -s2
        c[2, 0, 1] = s2
        c[0, 2, 1] = -s2
        c[1, 0, 0] = s2
        c[0, 1, 0] = -s2
    elif L == 2:
        c[2, 2, 4] = 1.0
        c[2, 1, 3] = s2
        c[1, 2, 3] = s2
        c[2, 0, 2] = s6
        c[1, 1, 2] = np.sqrt(2.0 / 3.0)
        c[0, 2, 2] = s6
        c[1, 0, 1] = s2
        c[0, 1, 1] = s2
        c[0, 0, 0] = 1.0
    return c


def real_cg_1_1(L):
    """Real CG tensor for 1 (x) 1 -> L, shape (3, 3, 2L+1)."""
    complex_cg = _complex_cg_1_1(L)
    r2c1 = _real2complex(1)
    c2rL = np.conjugate(_real2complex(L)).T
    real_cg = (r2c1.T @ complex_cg.reshape(3, -1)).reshape(complex_cg.shape)
    real_cg = real_cg.swapaxes(0, 1)
    real_cg = (r2c1.T @ real_cg.reshape(3, -1)).reshape(real_cg.shape)
    real_cg = real_cg.swapaxes(0, 1)
    real_cg = real_cg @ c2rL.T
    if (1 + 1 + L) % 2 == 0:
        rcg = np.real(real_cg)
    else:
        rcg = np.imag(real_cg)
    rcg = np.where((np.abs(rcg) > 0) & (np.abs(rcg) < 1e-14), 0.0, rcg)
    return rcg


# sphericart l=2 real solid-harmonic normalization constants
_C2_XY = float(np.sqrt(15.0 / (4.0 * np.pi)))     # m = -2, -1, +1
_C2_Z2 = float(np.sqrt(5.0 / (16.0 * np.pi)))     # m = 0
_C2_X2Y2 = float(np.sqrt(15.0 / (16.0 * np.pi)))  # m = +2
_C1 = float(np.sqrt(3.0 / (4.0 * np.pi)))         # l = 1


def _round_up(x, m):
    return (x + m - 1) // m * m


# ----------------------------------------------------------------------------
# In-kernel elementwise math — every value is a dense (8, 128) block
# (8 sublanes x 128 lanes = 1024 atoms).
# ----------------------------------------------------------------------------
def _sh_l2(x, y, z):
    """l=2 real solid harmonics (sphericart convention)."""
    xx, yy, zz = x * x, y * y, z * z
    return [
        _C2_XY * (x * y),
        _C2_XY * (y * z),
        _C2_Z2 * (2.0 * zz - xx - yy),
        _C2_XY * (x * z),
        _C2_X2Y2 * (xx - yy),
    ]


def _cg_combine_vec(A, B, C):
    """cg_combine('im,in,mnp->ip') with A,B lists of 3 blocks and C a (3,3,P)
    numpy constant.  Products A[m]*B[n] are memoized across output components."""
    P = C.shape[2]
    cache = {}

    def prod(m, n):
        if (m, n) not in cache:
            cache[(m, n)] = A[m] * B[n]
        return cache[(m, n)]

    outs = []
    for p in range(P):
        acc = None
        for m in range(3):
            for n in range(3):
                c = float(C[m, n, p])
                if c != 0.0:
                    term = c * prod(m, n)
                    acc = term if acc is None else acc + term
        outs.append(acc if acc is not None else jnp.zeros_like(A[0]))
    return outs


def tensor_basis_kernel(vb_ref, out_ref, *, cg112, cg111, cg110, chunks):
    # vb_ref : (18, bps, 128)  row = k*3 + m for combined vector k, spherical m
    # out_ref: (25, bps, 128)  row = p*5 + c of the (5,5) basis (no padding rows)
    # Inner loop over 1024-atom chunks keeps every value a single (8,128) vreg
    # (dense VALU, ~20-35 live vregs, no spills) while the grid step stays large
    # enough to amortize per-step pipeline overhead.
    for j in range(chunks):
        s0 = j * 8

        def comp(k, m):
            return vb_ref[3 * k + m, s0:s0 + 8, :]          # dense (8, 128)

        def vec(k):
            return [comp(k, m) for m in range(3)]           # m = -1, 0, +1

        # pseudoscalar first (keeps the 25 column values' live ranges short)
        ps = _cg_combine_vec(
            _cg_combine_vec(vec(3), vec(4), cg111), vec(5), cg110)[0]

        v1, v2, v3 = vec(0), vec(1), vec(2)

        def emit(c, col):
            for p in range(5):
                out_ref[p * 5 + c, s0:s0 + 8, :] = (col[p] * ps).astype(out_ref.dtype)

        # vector_basis[:, [2, 0, 1], k] -> (x, y, z): x = m(+1), y = m(-1), z = m(0)
        emit(0, _sh_l2(v1[2], v1[0], v1[1]))
        emit(1, _sh_l2(v2[2], v2[0], v2[1]))
        emit(2, _cg_combine_vec(v1, v2, cg112))
        emit(3, _cg_combine_vec(v1, v3, cg112))
        emit(4, _cg_combine_vec(v2, v3, cg112))


def tensor_basis_pallas(feats_t, n_atoms, w_main, w_pseudo, cg112, cg111, cg110,
                        *, max_atoms_per_step=8192, min_steps=2):
    """feats_t: (3F, N128) l=1 spherical expansion (row = m*F + f, atoms on the
    last axis, N128 a multiple of 128).  Returns the (n_atoms, 5, 5) basis."""
    three_f, n128 = feats_t.shape
    F = three_f // 3
    assert three_f == 3 * F
    assert n128 % 128 == 0 and n128 >= n_atoms
    assert max_atoms_per_step % 1024 == 0

    # One fused LinearMap contraction (main + pseudotensor VectorBasis) over the
    # un-relayouted feature slab.  Tiny matmul (reviewed as never the bottleneck);
    # f32 / HIGHEST precision to avoid bf16 degree-6 error amplification.
    w_all = jnp.concatenate([w_main, w_pseudo], axis=1)                   # (F, 6)
    eye3 = jnp.eye(3, dtype=w_all.dtype)
    w_rows = jnp.einsum('mn,fk->kmnf', eye3, w_all).reshape(18, 3 * F)    # (18, 3F)
    vb = jnp.dot(w_rows, feats_t,
                 precision=jax.lax.Precision.HIGHEST)                     # (18, N128)

    # Tile selection: blocks of 128 atoms; per-step sub-block count bps is a
    # multiple of 8 (dense (8,128) vregs), capped by max_atoms_per_step, and
    # chosen so the grid has >= min_steps parallel steps (v7x megacore).
    nb128 = n128 // 128
    bps = min(max_atoms_per_step // 128,
              _round_up(pl.cdiv(nb128, min_steps), 8))
    bps = max(bps, 8)
    nb = _round_up(nb128, bps)
    if nb != nb128:  # pad only the tiny 72 B/atom component slab, not the features
        vb = jnp.pad(vb, ((0, 0), (0, (nb - nb128) * 128)))
    vb = vb.reshape(18, nb, 128)      # free row-major reshape

    kernel = partial(tensor_basis_kernel, cg112=cg112, cg111=cg111, cg110=cg110,
                     chunks=bps // 8)
    out = pl.pallas_call(
        kernel,
        out_shape=jax.ShapeDtypeStruct((25, nb, 128), jnp.float32),
        grid=(nb // bps,),
        in_specs=[pl.BlockSpec((18, bps, 128), lambda i: (0, i, 0))],
        out_specs=pl.BlockSpec((25, bps, 128), lambda i: (0, i, 0)),
        compiler_params=pltpu.CompilerParams(
            dimension_semantics=("parallel",)),            # megacore-shardable
    )(vb)

    # (25, nb, 128) -> (25, nb*128) is a free reshape; drop padded atoms; the
    # final transpose to atom-major is a small (100 B/atom) XLA relayout.
    return out.reshape(25, nb * 128)[:, :n_atoms].T.reshape(n_atoms, 5, 5)


# ----------------------------------------------------------------------------
# Plain-JAX glue: surrogate l=1 spherical expansion (VectorBasis front half),
# built directly in the (3F, N128) layout the contraction consumes.
# ----------------------------------------------------------------------------
def _shifted_cosine_cutoff(r, rc, width):
    x = (r - (rc - width)) / width
    smooth = 0.5 * (1.0 + jnp.cos(jnp.pi * x))
    return jnp.where(r < rc - width, 1.0, jnp.where(r > rc, 0.0, smooth))


def spherical_expansion_l1(interatomic_vectors, centers, neighbors, species,
                           atomic_types, n_radial, rc, width, n_atoms):
    # TODO(synk): the exact LaplacianEigenstates radial basis lives inside the
    # external `spex` SphericalExpansion; an analytic cosine radial basis with
    # the same feature layout (species-major, radial-minor) is used instead.
    d = interatomic_vectors
    P = d.shape[0]
    r = jnp.sqrt(jnp.sum(d * d, axis=-1) + 1e-12)               # (P,)
    u = d / r[:, None]
    # l=1 spherical harmonics, m = -1, 0, +1  ~  (y, z, x)
    sh1 = _C1 * jnp.stack([u[:, 1], u[:, 2], u[:, 0]], axis=-1)  # (P, 3)
    n = jnp.arange(n_radial, dtype=jnp.float32)
    radial = jnp.cos(jnp.pi * (n[None, :] + 1.0) * r[:, None] / (2.0 * rc))
    radial = radial * _shifted_cosine_cutoff(r, rc, width)[:, None]  # (P, nr)
    neigh_species = species[neighbors]                           # (P,)
    onehot = (neigh_species[:, None]
              == jnp.asarray(atomic_types)[None, :]).astype(jnp.float32)
    feat2d = (onehot[:, :, None] * radial[:, None, :]).reshape(P, -1)   # (P, F)
    # (3F, P) per-pair contributions, row = m*F + f (m-major), then scatter-add
    # along the atom axis -> feature slab is born in its final layout (no later
    # transpose / re-pad passes over it).
    per_pair = (sh1.T[:, None, :] * feat2d.T[None, :, :]).reshape(-1, P)
    n128 = _round_up(n_atoms, 128)
    feats_t = jnp.zeros((per_pair.shape[0], n128), jnp.float32)
    feats_t = feats_t.at[:, centers].add(per_pair)
    return feats_t                                              # (3F, N128)


def tensor_basis_forward(interatomic_vectors, centers, neighbors, species,
                         structures, atom_index_in_structure, selected_atoms,
                         *, atomic_types, n_radial, rc, width,
                         w_main, w_pseudo, cg112, cg111, cg110,
                         max_atoms_per_step=8192, min_steps=2):
    assert selected_atoms is None  # TODO(synk): metatensor sample slicing not modeled
    num_atoms = atom_index_in_structure.shape[0]
    feats_t = spherical_expansion_l1(interatomic_vectors, centers, neighbors,
                                     species, atomic_types, n_radial, rc, width,
                                     num_atoms)
    return tensor_basis_pallas(feats_t, num_atoms, w_main, w_pseudo,
                               cg112, cg111, cg110,
                               max_atoms_per_step=max_atoms_per_step,
                               min_steps=min_steps)


# ----------------------------------------------------------------------------
# Pure-numpy float64 reference (same math as the torch forward, lambda=2 sigma=-1).
# ----------------------------------------------------------------------------
def tensor_basis_ref(feats, w_main, w_pseudo, cg112, cg111, cg110):
    vb_m = np.einsum('amf,fk->amk', feats, w_main)
    vb_p = np.einsum('amf,fk->amk', feats, w_pseudo)

    def cg(A, B, C):
        return np.einsum('im,in,mnp->ip', A, B, C)

    def sh_l2(xyz):
        x, y, z = xyz[:, 0], xyz[:, 1], xyz[:, 2]
        return np.stack([_C2_XY * x * y, _C2_XY * y * z,
                         _C2_Z2 * (2 * z * z - x * x - y * y),
                         _C2_XY * x * z, _C2_X2Y2 * (x * x - y * y)], axis=-1)

    N = feats.shape[0]
    basis = np.empty((N, 5, 5), dtype=np.float64)
    basis[:, :, 0] = sh_l2(vb_m[:, [2, 0, 1], 0])
    basis[:, :, 1] = sh_l2(vb_m[:, [2, 0, 1], 1])
    v1, v2, v3 = vb_m[:, :, 0], vb_m[:, :, 1], vb_m[:, :, 2]
    basis[:, :, 2] = cg(v1, v2, cg112)
    basis[:, :, 3] = cg(v1, v3, cg112)
    basis[:, :, 4] = cg(v2, v3, cg112)
    p1, p2, p3 = vb_p[:, :, 0], vb_p[:, :, 1], vb_p[:, :, 2]
    ps = cg(cg(p1, p2, cg111), p3, cg110)        # (N, 1)
    return basis * ps[:, None, :]


# ----------------------------------------------------------------------------
if __name__ == "__main__":
    atomic_types = [1, 6]
    n_atoms = 1100                # ragged: 9 blocks of 128 -> exercises padding + grid=2
    n_pairs = 4096
    n_radial = 64                 # -> F = 128 features, 3F = 384
    rc, width = 4.0, 0.5
    F = n_radial * len(atomic_types)

    key = jax.random.PRNGKey(0)
    k1, k2, k3, k4, k5, k6 = jax.random.split(key, 6)
    interatomic_vectors = jax.random.uniform(k1, (n_pairs, 3),
                                             minval=-1.0, maxval=1.0) * 2.5
    centers = jax.random.randint(k2, (n_pairs,), 0, n_atoms)
    neighbors = jax.random.randint(k3, (n_pairs,), 0, n_atoms)
    species = jnp.asarray(atomic_types)[
        jax.random.randint(k4, (n_atoms,), 0, len(atomic_types))]
    structures = jnp.zeros((n_atoms,), jnp.int32)
    atom_index_in_structure = jnp.arange(n_atoms)

    # Deterministic LinearMap weights (main and pseudotensor VectorBasis).
    w_main = jax.random.normal(k5, (F, 3), jnp.float32) / np.sqrt(F)
    w_pseudo = jax.random.normal(k6, (F, 3), jnp.float32) / np.sqrt(F)

    cg112, cg111, cg110 = real_cg_1_1(2), real_cg_1_1(1), real_cg_1_1(0)

    # Full forward (expansion + contraction + Pallas kernel); default tiling
    # gives a 2-step parallel grid (megacore) with 1024 atoms per step here.
    out = tensor_basis_forward(
        interatomic_vectors, centers, neighbors, species, structures,
        atom_index_in_structure, None,
        atomic_types=atomic_types, n_radial=n_radial, rc=rc, width=width,
        w_main=w_main, w_pseudo=w_pseudo,
        cg112=cg112, cg111=cg111, cg110=cg110,
        max_atoms_per_step=8192, min_steps=2)
    out = jax.block_until_ready(out)

    # Second config: single grid step with 2 inner 1024-atom chunks (chunks>1 path).
    feats_t = spherical_expansion_l1(interatomic_vectors, centers, neighbors,
                                     species, atomic_types, n_radial, rc, width,
                                     n_atoms)
    out2 = tensor_basis_pallas(feats_t, n_atoms, w_main, w_pseudo,
                               cg112, cg111, cg110,
                               max_atoms_per_step=8192, min_steps=1)
    out2 = jax.block_until_ready(out2)

    # float64 reference from the exact same f32 features / f32 weights.
    feats_np = (np.asarray(feats_t)[:, :n_atoms]
                .reshape(3, F, n_atoms).transpose(2, 0, 1).astype(np.float64))
    ref = tensor_basis_ref(feats_np,
                           np.asarray(w_main, dtype=np.float64),
                           np.asarray(w_pseudo, dtype=np.float64),
                           cg112, cg111, cg110)

    assert out.shape == (n_atoms, 5, 5)
    assert out2.shape == (n_atoms, 5, 5)
    np.testing.assert_allclose(np.asarray(out), ref, rtol=1e-3, atol=1e-5)
    np.testing.assert_allclose(np.asarray(out2), ref, rtol=1e-3, atol=1e-5)
    print("KERNEL_OK")
</pallas_src>

<mosaic_0001>
module attributes {stable_mosaic.version = 11 : i64} {
  func.func @tensor_basis_kernel(%arg0: i32, %arg1: memref<18x8x128xf32, #tpu.memory_space<vmem>>, %arg2: memref<25x8x128xf32, #tpu.memory_space<vmem>>) attributes {dimension_semantics = [#tpu.dimension_semantics<parallel>], iteration_bounds = array<i64: 2>, scalar_prefetch = 0 : i64, scratch_operands = 0 : i64, tpu.core_type = #tpu.core_type<tc>, window_params = [{transform_indices = @transform_0, window_bounds = array<i64: 18, 8, 128>}, {transform_indices = @transform_1, window_bounds = array<i64: 25, 8, 128>}]} {
    %c9 = arith.constant 9 : index
    %c0 = arith.constant 0 : index
    %c0_0 = arith.constant 0 : index
    %0 = vector.load %arg1[%c9, %c0, %c0_0] : memref<18x8x128xf32, #tpu.memory_space<vmem>>, vector<1x8x128xf32>
    %1 = vector.shape_cast %0 : vector<1x8x128xf32> to vector<8x128xf32>
    %c10 = arith.constant 10 : index
    %c0_1 = arith.constant 0 : index
    %c0_2 = arith.constant 0 : index
    %2 = vector.load %arg1[%c10, %c0_1, %c0_2] : memref<18x8x128xf32, #tpu.memory_space<vmem>>, vector<1x8x128xf32>
    %3 = vector.shape_cast %2 : vector<1x8x128xf32> to vector<8x128xf32>
    %c11 = arith.constant 11 : index
    %c0_3 = arith.constant 0 : index
    %c0_4 = arith.constant 0 : index
    %4 = vector.load %arg1[%c11, %c0_3, %c0_4] : memref<18x8x128xf32, #tpu.memory_space<vmem>>, vector<1x8x128xf32>
    %5 = vector.shape_cast %4 : vector<1x8x128xf32> to vector<8x128xf32>
    %c12 = arith.constant 12 : index
    %c0_5 = arith.constant 0 : index
    %c0_6 = arith.constant 0 : index
    %6 = vector.load %arg1[%c12, %c0_5, %c0_6] : memref<18x8x128xf32, #tpu.memory_space<vmem>>, vector<1x8x128xf32>
    %7 = vector.shape_cast %6 : vector<1x8x128xf32> to vector<8x128xf32>
    %c13 = arith.constant 13 : index
    %c0_7 = arith.constant 0 : index
    %c0_8 = arith.constant 0 : index
    %8 = vector.load %arg1[%c13, %c0_7, %c0_8] : memref<18x8x128xf32, #tpu.memory_space<vmem>>, vector<1x8x128xf32>
    %9 = vector.shape_cast %8 : vector<1x8x128xf32> to vector<8x128xf32>
    %c14 = arith.constant 14 : index
    %c0_9 = arith.constant 0 : index
    %c0_10 = arith.constant 0 : index
    %10 = vector.load %arg1[%c14, %c0_9, %c0_10] : memref<18x8x128xf32, #tpu.memory_space<vmem>>, vector<1x8x128xf32>
    %11 = vector.shape_cast %10 : vector<1x8x128xf32> to vector<8x128xf32>
    %12 = arith.mulf %3, %11 : vector<8x128xf32>
    %cst = arith.constant 0.707106769 : f32
    %13 = vector.broadcast %cst : f32 to vector<8x128xf32>
    %14 = arith.mulf %13, %12 : vector<8x128xf32>
    %15 = arith.mulf %5, %9 : vector<8x128xf32>
    %cst_11 = arith.constant -0.707106769 : f32
    %16 = vector.broadcast %cst_11 : f32 to vector<8x128xf32>
    %17 = arith.mulf %16, %15 : vector<8x128xf32>
    %18 = arith.addf %14, %17 : vector<8x128xf32>
    %19 = arith.mulf %1, %11 : vector<8x128xf32>
    %cst_12 = arith.constant -0.707106769 : f32
    %20 = vector.broadcast %cst_12 : f32 to vector<8x128xf32>
    %21 = arith.mulf %20, %19 : vector<8x128xf32>
    %22 = arith.mulf %5, %7 : vector<8x128xf32>
    %cst_13 = arith.constant 0.707106769 : f32
    %23 = vector.broadcast %cst_13 : f32 to vector<8x128xf32>
    %24 = arith.mulf %23, %22 : vector<8x128xf32>
    %25 = arith.addf %21, %24 : vector<8x128xf32>
    %26 = arith.mulf %1, %9 : vector<8x128xf32>
    %cst_14 = arith.constant 0.707106769 : f32
    %27 = vector.broadcast %cst_14 : f32 to vector<8x128xf32>
    %28 = arith.mulf %27, %26 : vector<8x128xf32>
    %29 = arith.mulf %3, %7 : vector<8x128xf32>
    %cst_15 = arith.constant -0.707106769 : f32
    %30 = vector.broadcast %cst_15 : f32 to vector<8x128xf32>
    %31 = arith.mulf %30, %29 : vector<8x128xf32>
    %32 = arith.addf %28, %31 : vector<8x128xf32>
    %c15 = arith.constant 15 : index
    %c0_16 = arith.constant 0 : index
    %c0_17 = arith.constant 0 : index
    %33 = vector.load %arg1[%c15, %c0_16, %c0_17] : memref<18x8x128xf32, #tpu.memory_space<vmem>>, vector<1x8x128xf32>
    %34 = vector.shape_cast %33 : vector<1x8x128xf32> to vector<8x128xf32>
    %c16 = arith.constant 16 : index
    %c0_18 = arith.constant 0 : index
    %c0_19 = arith.constant 0 : index
    %35 = vector.load %arg1[%c16, %c0_18, %c0_19] : memref<18x8x128xf32, #tpu.memory_space<vmem>>, vector<1x8x128xf32>
    %36 = vector.shape_cast %35 : vector<1x8x128xf32> to vector<8x128xf32>
    %c17 = arith.constant 17 : index
    %c0_20 = arith.constant 0 : index
    %c0_21 = arith.constant 0 : index
    %37 = vector.load %arg1[%c17, %c0_20, %c0_21] : memref<18x8x128xf32, #tpu.memory_space<vmem>>, vector<1x8x128xf32>
    %38 = vector.shape_cast %37 : vector<1x8x128xf32> to vector<8x128xf32>
    %39 = arith.mulf %18, %34 : vector<8x128xf32>
    %cst_22 = arith.constant -0.577350259 : f32
    %40 = vector.broadcast %cst_22 : f32 to vector<8x128xf32>
    %41 = arith.mulf %40, %39 : vector<8x128xf32>
    %42 = arith.mulf %25, %36 : vector<8x128xf32>
    %cst_23 = arith.constant -0.577350259 : f32
    %43 = vector.broadcast %cst_23 : f32 to vector<8x128xf32>
    %44 = arith.mulf %43, %42 : vector<8x128xf32>
    %45 = arith.addf %41, %44 : vector<8x128xf32>
    %46 = arith.mulf %32, %38 : vector<8x128xf32>
    %cst_24 = arith.constant -0.577350259 : f32
    %47 = vector.broadcast %cst_24 : f32 to vector<8x128xf32>
    %48 = arith.mulf %47, %46 : vector<8x128xf32>
    %49 = arith.addf %45, %48 : vector<8x128xf32>
    %c0_25 = arith.constant 0 : index
    %c0_26 = arith.constant 0 : index
    %c0_27 = arith.constant 0 : index
    %50 = vector.load %arg1[%c0_25, %c0_26, %c0_27] : memref<18x8x128xf32, #tpu.memory_space<vmem>>, vector<1x8x128xf32>
    %51 = vector.shape_cast %50 : vector<1x8x128xf32> to vector<8x128xf32>
    %c1 = arith.constant 1 : index
    %c0_28 = arith.constant 0 : index
    %c0_29 = arith.constant 0 : index
    %52 = vector.load %arg1[%c1, %c0_28, %c0_29] : memref<18x8x128xf32, #tpu.memory_space<vmem>>, vector<1x8x128xf32>
    %53 = vector.shape_cast %52 : vector<1x8x128xf32> to vector<8x128xf32>
    %c2 = arith.constant 2 : index
    %c0_30 = arith.constant 0 : index
    %c0_31 = arith.constant 0 : index
    %54 = vector.load %arg1[%c2, %c0_30, %c0_31] : memref<18x8x128xf32, #tpu.memory_space<vmem>>, vector<1x8x128xf32>
    %55 = vector.shape_cast %54 : vector<1x8x128xf32> to vector<8x128xf32>
    %c3 = arith.constant 3 : index
    %c0_32 = arith.constant 0 : index
    %c0_33 = arith.constant 0 : index
    %56 = vector.load %arg1[%c3, %c0_32, %c0_33] : memref<18x8x128xf32, #tpu.memory_space<vmem>>, vector<1x8x128xf32>
    %57 = vector.shape_cast %56 : vector<1x8x128xf32> to vector<8x128xf32>
    %c4 = arith.constant 4 : index
    %c0_34 = arith.constant 0 : index
    %c0_35 = arith.constant 0 : index
    %58 = vector.load %arg1[%c4, %c0_34, %c0_35] : memref<18x8x128xf32, #tpu.memory_space<vmem>>, vector<1x8x128xf32>
    %59 = vector.shape_cast %58 : vector<1x8x128xf32> to vector<8x128xf32>
    %c5 = arith.constant 5 : index
    %c0_36 = arith.constant 0 : index
    %c0_37 = arith.constant 0 : index
    %60 = vector.load %arg1[%c5, %c0_36, %c0_37] : memref<18x8x128xf32, #tpu.memory_space<vmem>>, vector<1x8x128xf32>
    %61 = vector.shape_cast %60 : vector<1x8x128xf32> to vector<8x128xf32>
    %c6 = arith.constant 6 : index
    %c0_38 = arith.constant 0 : index
    %c0_39 = arith.constant 0 : index
    %62 = vector.load %arg1[%c6, %c0_38, %c0_39] : memref<18x8x128xf32, #tpu.memory_space<vmem>>, vector<1x8x128xf32>
    %63 = vector.shape_cast %62 : vector<1x8x128xf32> to vector<8x128xf32>
    %c7 = arith.constant 7 : index
    %c0_40 = arith.constant 0 : index
    %c0_41 = arith.constant 0 : index
    %64 = vector.load %arg1[%c7, %c0_40, %c0_41] : memref<18x8x128xf32, #tpu.memory_space<vmem>>, vector<1x8x128xf32>
    %65 = vector.shape_cast %64 : vector<1x8x128xf32> to vector<8x128xf32>
    %c8 = arith.constant 8 : index
    %c0_42 = arith.constant 0 : index
    %c0_43 = arith.constant 0 : index
    %66 = vector.load %arg1[%c8, %c0_42, %c0_43] : memref<18x8x128xf32, #tpu.memory_space<vmem>>, vector<1x8x128xf32>
    %67 = vector.shape_cast %66 : vector<1x8x128xf32> to vector<8x128xf32>
    %68 = arith.mulf %55, %55 : vector<8x128xf32>
    %69 = arith.mulf %51, %51 : vector<8x128xf32>
    %70 = arith.mulf %53, %53 : vector<8x128xf32>
    %71 = arith.mulf %55, %51 : vector<8x128xf32>
    %cst_44 = arith.constant 1.09254849 : f32
    %72 = vector.broadcast %cst_44 : f32 to vector<8x128xf32>
    %73 = arith.mulf %72, %71 : vector<8x128xf32>
    %74 = arith.mulf %51, %53 : vector<8x128xf32>
    %cst_45 = arith.constant 1.09254849 : f32
    %75 = vector.broadcast %cst_45 : f32 to vector<8x128xf32>
    %76 = arith.mulf %75, %74 : vector<8x128xf32>
    %cst_46 = arith.constant 2.000000e+00 : f32
    %77 = vector.broadcast %cst_46 : f32 to vector<8x128xf32>
    %78 = arith.mulf %77, %70 : vector<8x128xf32>
    %79 = arith.subf %78, %68 : vector<8x128xf32>
    %80 = arith.subf %79, %69 : vector<8x128xf32>
    %cst_47 = arith.constant 0.31539157 : f32
    %81 = vector.broadcast %cst_47 : f32 to vector<8x128xf32>
    %82 = arith.mulf %81, %80 : vector<8x128xf32>
    %83 = arith.mulf %55, %53 : vector<8x128xf32>
    %cst_48 = arith.constant 1.09254849 : f32
    %84 = vector.broadcast %cst_48 : f32 to vector<8x128xf32>
    %85 = arith.mulf %84, %83 : vector<8x128xf32>
    %86 = arith.subf %68, %69 : vector<8x128xf32>
    %cst_49 = arith.constant 0.546274245 : f32
    %87 = vector.broadcast %cst_49 : f32 to vector<8x128xf32>
    %88 = arith.mulf %87, %86 : vector<8x128xf32>
    %89 = arith.mulf %73, %49 : vector<8x128xf32>
    %c0_50 = arith.constant 0 : index
    %c0_51 = arith.constant 0 : index
    %c0_52 = arith.constant 0 : index
    %90 = vector.load %arg2[%c0_50, %c0_51, %c0_52] : memref<25x8x128xf32, #tpu.memory_space<vmem>>, vector<1x8x128xf32>
    %91 = vector.shape_cast %90 : vector<1x8x128xf32> to vector<8x128xf32>
    %92 = vector.shape_cast %89 : vector<8x128xf32> to vector<1x8x128xf32>
    tpu.vector_store %arg2[%c0_50, %c0_51, %c0_52], %92 {strides = array<i32>} : memref<25x8x128xf32, #tpu.memory_space<vmem>>, vector<1x8x128xf32>,
    %93 = arith.mulf %76, %49 : vector<8x128xf32>
    %c5_53 = arith.constant 5 : index
    %c0_54 = arith.constant 0 : index
    %c0_55 = arith.constant 0 : index
    %94 = vector.load %arg2[%c5_53, %c0_54, %c0_55] : memref<25x8x128xf32, #tpu.memory_space<vmem>>, vector<1x8x128xf32>
    %95 = vector.shape_cast %94 : vector<1x8x128xf32> to vector<8x128xf32>
    %96 = vector.shape_cast %93 : vector<8x128xf32> to vector<1x8x128xf32>
    tpu.vector_store %arg2[%c5_53, %c0_54, %c0_55], %96 {strides = array<i32>} : memref<25x8x128xf32, #tpu.memory_space<vmem>>, vector<1x8x128xf32>,
    %97 = arith.mulf %82, %49 : vector<8x128xf32>
    %c10_56 = arith.constant 10 : index
    %c0_57 = arith.constant 0 : index
    %c0_58 = arith.constant 0 : index
    %98 = vector.load %arg2[%c10_56, %c0_57, %c0_58] : memref<25x8x128xf32, #tpu.memory_space<vmem>>, vector<1x8x128xf32>
    %99 = vector.shape_cast %98 : vector<1x8x128xf32> to vector<8x128xf32>
    %100 = vector.shape_cast %97 : vector<8x128xf32> to vector<1x8x128xf32>
    tpu.vector_store %arg2[%c10_56, %c0_57, %c0_58], %100 {strides = array<i32>} : memref<25x8x128xf32, #tpu.memory_space<vmem>>, vector<1x8x128xf32>,
    %101 = arith.mulf %85, %49 : vector<8x128xf32>
    %c15_59 = arith.constant 15 : index
    %c0_60 = arith.constant 0 : index
    %c0_61 = arith.constant 0 : index
    %102 = vector.load %arg2[%c15_59, %c0_60, %c0_61] : memref<25x8x128xf32, #tpu.memory_space<vmem>>, vector<1x8x128xf32>
    %103 = vector.shape_cast %102 : vector<1x8x128xf32> to vector<8x128xf32>
    %104 = vector.shape_cast %101 : vector<8x128xf32> to vector<1x8x128xf32>
    tpu.vector_store %arg2[%c15_59, %c0_60, %c0_61], %104 {strides = array<i32>} : memref<25x8x128xf32, #tpu.memory_space<vmem>>, vector<1x8x128xf32>,
    %105 = arith.mulf %88, %49 : vector<8x128xf32>
    %c20 = arith.constant 20 : index
    %c0_62 = arith.constant 0 : index
    %c0_63 = arith.constant 0 : index
    %106 = vector.load %arg2[%c20, %c0_62, %c0_63] : memref<25x8x128xf32, #tpu.memory_space<vmem>>, vector<1x8x128xf32>
    %107 = vector.shape_cast %106 : vector<1x8x128xf32> to vector<8x128xf32>
    %108 = vector.shape_cast %105 : vector<8x128xf32> to vector<1x8x128xf32>
    tpu.vector_store %arg2[%c20, %c0_62, %c0_63], %108 {strides = array<i32>} : memref<25x8x128xf32, #tpu.memory_space<vmem>>, vector<1x8x128xf32>,
    %109 = arith.mulf %61, %61 : vector<8x128xf32>
    %110 = arith.mulf %57, %57 : vector<8x128xf32>
    %111 = arith.mulf %59, %59 : vector<8x128xf32>
    %112 = arith.mulf %61, %57 : vector<8x128xf32>
    %cst_64 = arith.constant 1.09254849 : f32
    %113 = vector.broadcast %cst_64 : f32 to vector<8x128xf32>
    %114 = arith.mulf %113, %112 : vector<8x128xf32>
    %115 = arith.mulf %57, %59 : vector<8x128xf32>
    %cst_65 = arith.constant 1.09254849 : f32
    %116 = vector.broadcast %cst_65 : f32 to vector<8x128xf32>
    %117 = arith.mulf %116, %115 : vector<8x128xf32>
    %cst_66 = arith.constant 2.000000e+00 : f32
    %118 = vector.broadcast %cst_66 : f32 to vector<8x128xf32>
    %119 = arith.mulf %118, %111 : vector<8x128xf32>
    %120 = arith.subf %119, %109 : vector<8x128xf32>
    %121 = arith.subf %120, %110 : vector<8x128xf32>
    %cst_67 = arith.constant 0.31539157 : f32
    %122 = vector.broadcast %cst_67 : f32 to vector<8x128xf32>
    %123 = arith.mulf %122, %121 : vector<8x128xf32>
    %124 = arith.mulf %61, %59 : vector<8x128xf32>
    %cst_68 = arith.constant 1.09254849 : f32
    %125 = vector.broadcast %cst_68 : f32 to vector<8x128xf32>
    %126 = arith.mulf %125, %124 : vector<8x128xf32>
    %127 = arith.subf %109, %110 : vector<8x128xf32>
    %cst_69 = arith.constant 0.546274245 : f32
    %128 = vector.broadcast %cst_69 : f32 to vector<8x128xf32>
    %129 = arith.mulf %128, %127 : vector<8x128xf32>
    %130 = arith.mulf %114, %49 : vector<8x128xf32>
    %c1_70 = arith.constant 1 : index
    %c0_71 = arith.constant 0 : index
    %c0_72 = arith.constant 0 : index
    %131 = vector.load %arg2[%c1_70, %c0_71, %c0_72] : memref<25x8x128xf32, #tpu.memory_space<vmem>>, vector<1x8x128xf32>
    %132 = vector.shape_cast %131 : vector<1x8x128xf32> to vector<8x128xf32>
    %133 = vector.shape_cast %130 : vector<8x128xf32> to vector<1x8x128xf32>
    tpu.vector_store %arg2[%c1_70, %c0_71, %c0_72], %133 {strides = array<i32>} : memref<25x8x128xf32, #tpu.memory_space<vmem>>, vector<1x8x128xf32>,
    %134 = arith.mulf %117, %49 : vector<8x128xf32>
    %c6_73 = arith.constant 6 : index
    %c0_74 = arith.constant 0 : index
    %c0_75 = arith.constant 0 : index
    %135 = vector.load %arg2[%c6_73, %c0_74, %c0_75] : memref<25x8x128xf32, #tpu.memory_space<vmem>>, vector<1x8x128xf32>
    %136 = vector.shape_cast %135 : vector<1x8x128xf32> to vector<8x128xf32>
    %137 = vector.shape_cast %134 : vector<8x128xf32> to vector<1x8x128xf32>
    tpu.vector_store %arg2[%c6_73, %c0_74, %c0_75], %137 {strides = array<i32>} : memref<25x8x128xf32, #tpu.memory_space<vmem>>, vector<1x8x128xf32>,
    %138 = arith.mulf %123, %49 : vector<8x128xf32>
    %c11_76 = arith.constant 11 : index
    %c0_77 = arith.constant 0 : index
    %c0_78 = arith.constant 0 : index
    %139 = vector.load %arg2[%c11_76, %c0_77, %c0_78] : memref<25x8x128xf32, #tpu.memory_space<vmem>>, vector<1x8x128xf32>
    %140 = vector.shape_cast %139 : vector<1x8x128xf32> to vector<8x128xf32>
    %141 = vector.shape_cast %138 : vector<8x128xf32> to vector<1x8x128xf32>
    tpu.vector_store %arg2[%c11_76, %c0_77, %c0_78], %141 {strides = array<i32>} : memref<25x8x128xf32, #tpu.memory_space<vmem>>, vector<1x8x128xf32>,
    %142 = arith.mulf %126, %49 : vector<8x128xf32>
    %c16_79 = arith.constant 16 : index
    %c0_80 = arith.constant 0 : index
    %c0_81 = arith.constant 0 : index
    %143 = vector.load %arg2[%c16_79, %c0_80, %c0_81] : memref<25x8x128xf32, #tpu.memory_space<vmem>>, vector<1x8x128xf32>
    %144 = vector.shape_cast %143 : vector<1x8x128xf32> to vector<8x128xf32>
    %145 = vector.shape_cast %142 : vector<8x128xf32> to vector<1x8x128xf32>
    tpu.vector_store %arg2[%c16_79, %c0_80, %c0_81], %145 {strides = array<i32>} : memref<25x8x128xf32, #tpu.memory_space<vmem>>, vector<1x8x128xf32>,
    %146 = arith.mulf %129, %49 : vector<8x128xf32>
    %c21 = arith.constant 21 : index
    %c0_82 = arith.constant 0 : index
    %c0_83 = arith.constant 0 : index
    %147 = vector.load %arg2[%c21, %c0_82, %c0_83] : memref<25x8x128xf32, #tpu.memory_space<vmem>>, vector<1x8x128xf32>
    %148 = vector.shape_cast %147 : vector<1x8x128xf32> to vector<8x128xf32>
    %149 = vector.shape_cast %146 : vector<8x128xf32> to vector<1x8x128xf32>
    tpu.vector_store %arg2[%c21, %c0_82, %c0_83], %149 {strides = array<i32>} : memref<25x8x128xf32, #tpu.memory_space<vmem>>, vector<1x8x128xf32>,
    %150 = arith.mulf %51, %61 : vector<8x128xf32>
    %cst_84 = arith.constant 0.707106769 : f32
    %151 = vector.broadcast %cst_84 : f32 to vector<8x128xf32>
    %152 = arith.mulf %151, %150 : vector<8x128xf32>
    %153 = arith.mulf %55, %57 : vector<8x128xf32>
    %cst_85 = arith.constant 0.707106769 : f32
    %154 = vector.broadcast %cst_85 : f32 to vector<8x128xf32>
    %155 = arith.mulf %154, %153 : vector<8x128xf32>
    %156 = arith.addf %152, %155 : vector<8x128xf32>
    %157 = arith.mulf %51, %59 : vector<8x128xf32>
    %cst_86 = arith.constant 0.707106769 : f32
    %158 = vector.broadcast %cst_86 : f32 to vector<8x128xf32>
    %159 = arith.mulf %158, %157 : vector<8x128xf32>
    %160 = arith.mulf %53, %57 : vector<8x128xf32>
    %cst_87 = arith.constant 0.707106769 : f32
    %161 = vector.broadcast %cst_87 : f32 to vector<8x128xf32>
    %162 = arith.mulf %161, %160 : vector<8x128xf32>
    %163 = arith.addf %159, %162 : vector<8x128xf32>
    %164 = arith.mulf %51, %57 : vector<8x128xf32>
    %cst_88 = arith.constant -0.408248305 : f32
    %165 = vector.broadcast %cst_88 : f32 to vector<8x128xf32>
    %166 = arith.mulf %165, %164 : vector<8x128xf32>
    %167 = arith.mulf %53, %59 : vector<8x128xf32>
    %cst_89 = arith.constant 0.816496611 : f32
    %168 = vector.broadcast %cst_89 : f32 to vector<8x128xf32>
    %169 = arith.mulf %168, %167 : vector<8x128xf32>
    %170 = arith.addf %166, %169 : vector<8x128xf32>
    %171 = arith.mulf %55, %61 : vector<8x128xf32>
    %cst_90 = arith.constant -0.408248305 : f32
    %172 = vector.broadcast %cst_90 : f32 to vector<8x128xf32>
    %173 = arith.mulf %172, %171 : vector<8x128xf32>
    %174 = arith.addf %170, %173 : vector<8x128xf32>
    %175 = arith.mulf %53, %61 : vector<8x128xf32>
    %cst_91 = arith.constant 0.707106769 : f32
    %176 = vector.broadcast %cst_91 : f32 to vector<8x128xf32>
    %177 = arith.mulf %176, %175 : vector<8x128xf32>
    %178 = arith.mulf %55, %59 : vector<8x128xf32>
    %cst_92 = arith.constant 0.707106769 : f32
    %179 = vector.broadcast %cst_92 : f32 to vector<8x128xf32>
    %180 = arith.mulf %179, %178 : vector<8x128xf32>
    %181 = arith.addf %177, %180 : vector<8x128xf32>
    %cst_93 = arith.constant -0.707106769 : f32
    %182 = vector.broadcast %cst_93 : f32 to vector<8x128xf32>
    %183 = arith.mulf %182, %164 : vector<8x128xf32>
    %cst_94 = arith.constant 0.707106769 : f32
    %184 = vector.broadcast %cst_94 : f32 to vector<8x128xf32>
    %185 = arith.mulf %184, %171 : vector<8x128xf32>
    %186 = arith.addf %183, %185 : vector<8x128xf32>
    %187 = arith.mulf %156, %49 : vector<8x128xf32>
    %c2_95 = arith.constant 2 : index
    %c0_96 = arith.constant 0 : index
    %c0_97 = arith.constant 0 : index
    %188 = vector.load %arg2[%c2_95, %c0_96, %c0_97] : memref<25x8x128xf32, #tpu.memory_space<vmem>>, vector<1x8x128xf32>
    %189 = vector.shape_cast %188 : vector<1x8x128xf32> to vector<8x128xf32>
    %190 = vector.shape_cast %187 : vector<8x128xf32> to vector<1x8x128xf32>
    tpu.vector_store %arg2[%c2_95, %c0_96, %c0_97], %190 {strides = array<i32>} : memref<25x8x128xf32, #tpu.memory_space<vmem>>, vector<1x8x128xf32>,
    %191 = arith.mulf %163, %49 : vector<8x128xf32>
    %c7_98 = arith.constant 7 : index
    %c0_99 = arith.constant 0 : index
    %c0_100 = arith.constant 0 : index
    %192 = vector.load %arg2[%c7_98, %c0_99, %c0_100] : memref<25x8x128xf32, #tpu.memory_space<vmem>>, vector<1x8x128xf32>
    %193 = vector.shape_cast %192 : vector<1x8x128xf32> to vector<8x128xf32>
    %194 = vector.shape_cast %191 : vector<8x128xf32> to vector<1x8x128xf32>
    tpu.vector_store %arg2[%c7_98, %c0_99, %c0_100], %194 {strides = array<i32>} : memref<25x8x128xf32, #tpu.memory_space<vmem>>, vector<1x8x128xf32>,
    %195 = arith.mulf %174, %49 : vector<8x128xf32>
    %c12_101 = arith.constant 12 : index
    %c0_102 = arith.constant 0 : index
    %c0_103 = arith.constant 0 : index
    %196 = vector.load %arg2[%c12_101, %c0_102, %c0_103] : memref<25x8x128xf32, #tpu.memory_space<vmem>>, vector<1x8x128xf32>
    %197 = vector.shape_cast %196 : vector<1x8x128xf32> to vector<8x128xf32>
    %198 = vector.shape_cast %195 : vector<8x128xf32> to vector<1x8x128xf32>
    tpu.vector_store %arg2[%c12_101, %c0_102, %c0_103], %198 {strides = array<i32>} : memref<25x8x128xf32, #tpu.memory_space<vmem>>, vector<1x8x128xf32>,
    %199 = arith.mulf %181, %49 : vector<8x128xf32>
    %c17_104 = arith.constant 17 : index
    %c0_105 = arith.constant 0 : index
    %c0_106 = arith.constant 0 : index
    %200 = vector.load %arg2[%c17_104, %c0_105, %c0_106] : memref<25x8x128xf32, #tpu.memory_space<vmem>>, vector<1x8x128xf32>
    %201 = vector.shape_cast %200 : vector<1x8x128xf32> to vector<8x128xf32>
    %202 = vector.shape_cast %199 : vector<8x128xf32> to vector<1x8x128xf32>
    tpu.vector_store %arg2[%c17_104, %c0_105, %c0_106], %202 {strides = array<i32>} : memref<25x8x128xf32, #tpu.memory_space<vmem>>, vector<1x8x128xf32>,
    %203 = arith.mulf %186, %49 : vector<8x128xf32>
    %c22 = arith.constant 22 : index
    %c0_107 = arith.constant 0 : index
    %c0_108 = arith.constant 0 : index
    %204 = vector.load %arg2[%c22, %c0_107, %c0_108] : memref<25x8x128xf32, #tpu.memory_space<vmem>>, vector<1x8x128xf32>
    %205 = vector.shape_cast %204 : vector<1x8x128xf32> to vector<8x128xf32>
    %206 = vector.shape_cast %203 : vector<8x128xf32> to vector<1x8x128xf32>
    tpu.vector_store %arg2[%c22, %c0_107, %c0_108], %206 {strides = array<i32>} : memref<25x8x128xf32, #tpu.memory_space<vmem>>, vector<1x8x128xf32>,
    %207 = arith.mulf %51, %67 : vector<8x128xf32>
    %cst_109 = arith.constant 0.707106769 : f32
    %208 = vector.broadcast %cst_109 : f32 to vector<8x128xf32>
    %209 = arith.mulf %208, %207 : vector<8x128xf32>
    %210 = arith.mulf %55, %63 : vector<8x128xf32>
    %cst_110 = arith.constant 0.707106769 : f32
    %211 = vector.broadcast %cst_110 : f32 to vector<8x128xf32>
    %212 = arith.mulf %211, %210 : vector<8x128xf32>
    %213 = arith.addf %209, %212 : vector<8x128xf32>
    %214 = arith.mulf %51, %65 : vector<8x128xf32>
    %cst_111 = arith.constant 0.707106769 : f32
    %215 = vector.broadcast %cst_111 : f32 to vector<8x128xf32>
    %216 = arith.mulf %215, %214 : vector<8x128xf32>
    %217 = arith.mulf %53, %63 : vector<8x128xf32>
    %cst_112 = arith.constant 0.707106769 : f32
    %218 = vector.broadcast %cst_112 : f32 to vector<8x128xf32>
    %219 = arith.mulf %218, %217 : vector<8x128xf32>
    %220 = arith.addf %216, %219 : vector<8x128xf32>
    %221 = arith.mulf %51, %63 : vector<8x128xf32>
    %cst_113 = arith.constant -0.408248305 : f32
    %222 = vector.broadcast %cst_113 : f32 to vector<8x128xf32>
    %223 = arith.mulf %222, %221 : vector<8x128xf32>
    %224 = arith.mulf %53, %65 : vector<8x128xf32>
    %cst_114 = arith.constant 0.816496611 : f32
    %225 = vector.broadcast %cst_114 : f32 to vector<8x128xf32>
    %226 = arith.mulf %225, %224 : vector<8x128xf32>
    %227 = arith.addf %223, %226 : vector<8x128xf32>
    %228 = arith.mulf %55, %67 : vector<8x128xf32>
    %cst_115 = arith.constant -0.408248305 : f32
    %229 = vector.broadcast %cst_115 : f32 to vector<8x128xf32>
    %230 = arith.mulf %229, %228 : vector<8x128xf32>
    %231 = arith.addf %227, %230 : vector<8x128xf32>
    %232 = arith.mulf %53, %67 : vector<8x128xf32>
    %cst_116 = arith.constant 0.707106769 : f32
    %233 = vector.broadcast %cst_116 : f32 to vector<8x128xf32>
    %234 = arith.mulf %233, %232 : vector<8x128xf32>
    %235 = arith.mulf %55, %65 : vector<8x128xf32>
    %cst_117 = arith.constant 0.707106769 : f32
    %236 = vector.broadcast %cst_117 : f32 to vector<8x128xf32>
    %237 = arith.mulf %236, %235 : vector<8x128xf32>
    %238 = arith.addf %234, %237 : vector<8x128xf32>
    %cst_118 = arith.constant -0.707106769 : f32
    %239 = vector.broadcast %cst_118 : f32 to vector<8x128xf32>
    %240 = arith.mulf %239, %221 : vector<8x128xf32>
    %cst_119 = arith.constant 0.707106769 : f32
    %241 = vector.broadcast %cst_119 : f32 to vector<8x128xf32>
    %242 = arith.mulf %241, %228 : vector<8x128xf32>
    %243 = arith.addf %240, %242 : vector<8x128xf32>
    %244 = arith.mulf %213, %49 : vector<8x128xf32>
    %c3_120 = arith.constant 3 : index
    %c0_121 = arith.constant 0 : index
    %c0_122 = arith.constant 0 : index
    %245 = vector.load %arg2[%c3_120, %c0_121, %c0_122] : memref<25x8x128xf32, #tpu.memory_space<vmem>>, vector<1x8x128xf32>
    %246 = vector.shape_cast %245 : vector<1x8x128xf32> to vector<8x128xf32>
    %247 = vector.shape_cast %244 : vector<8x128xf32> to vector<1x8x128xf32>
    tpu.vector_store %arg2[%c3_120, %c0_121, %c0_122], %247 {strides = array<i32>} : memref<25x8x128xf32, #tpu.memory_space<vmem>>, vector<1x8x128xf32>,
    %248 = arith.mulf %220, %49 : vector<8x128xf32>
    %c8_123 = arith.constant 8 : index
    %c0_124 = arith.constant 0 : index
    %c0_125 = arith.constant 0 : index
    %249 = vector.load %arg2[%c8_123, %c0_124, %c0_125] : memref<25x8x128xf32, #tpu.memory_space<vmem>>, vector<1x8x128xf32>
    %250 = vector.shape_cast %249 : vector<1x8x128xf32> to vector<8x128xf32>
    %251 = vector.shape_cast %248 : vector<8x128xf32> to vector<1x8x128xf32>
    tpu.vector_store %arg2[%c8_123, %c0_124, %c0_125], %251 {strides = array<i32>} : memref<25x8x128xf32, #tpu.memory_space<vmem>>, vector<1x8x128xf32>,
    %252 = arith.mulf %231, %49 : vector<8x128xf32>
    %c13_126 = arith.constant 13 : index
    %c0_127 = arith.constant 0 : index
    %c0_128 = arith.constant 0 : index
    %253 = vector.load %arg2[%c13_126, %c0_127, %c0_128] : memref<25x8x128xf32, #tpu.memory_space<vmem>>, vector<1x8x128xf32>
    %254 = vector.shape_cast %253 : vector<1x8x128xf32> to vector<8x128xf32>
    %255 = vector.shape_cast %252 : vector<8x128xf32> to vector<1x8x128xf32>
    tpu.vector_store %arg2[%c13_126, %c0_127, %c0_128], %255 {strides = array<i32>} : memref<25x8x128xf32, #tpu.memory_space<vmem>>, vector<1x8x128xf32>,
    %256 = arith.mulf %238, %49 : vector<8x128xf32>
    %c18 = arith.constant 18 : index
    %c0_129 = arith.constant 0 : index
    %c0_130 = arith.constant 0 : index
    %257 = vector.load %arg2[%c18, %c0_129, %c0_130] : memref<25x8x128xf32, #tpu.memory_space<vmem>>, vector<1x8x128xf32>
    %258 = vector.shape_cast %257 : vector<1x8x128xf32> to vector<8x128xf32>
    %259 = vector.shape_cast %256 : vector<8x128xf32> to vector<1x8x128xf32>
    tpu.vector_store %arg2[%c18, %c0_129, %c0_130], %259 {strides = array<i32>} : memref<25x8x128xf32, #tpu.memory_space<vmem>>, vector<1x8x128xf32>,
    %260 = arith.mulf %243, %49 : vector<8x128xf32>
    %c23 = arith.constant 23 : index
    %c0_131 = arith.constant 0 : index
    %c0_132 = arith.constant 0 : index
    %261 = vector.load %arg2[%c23, %c0_131, %c0_132] : memref<25x8x128xf32, #tpu.memory_space<vmem>>, vector<1x8x128xf32>
    %262 = vector.shape_cast %261 : vector<1x8x128xf32> to vector<8x128xf32>
    %263 = vector.shape_cast %260 : vector<8x128xf32> to vector<1x8x128xf32>
    tpu.vector_store %arg2[%c23, %c0_131, %c0_132], %263 {strides = array<i32>} : memref<25x8x128xf32, #tpu.memory_space<vmem>>, vector<1x8x128xf32>,
    %264 = arith.mulf %57, %67 : vector<8x128xf32>
    %cst_133 = arith.constant 0.707106769 : f32
    %265 = vector.broadcast %cst_133 : f32 to vector<8x128xf32>
    %266 = arith.mulf %265, %264 : vector<8x128xf32>
    %267 = arith.mulf %61, %63 : vector<8x128xf32>
    %cst_134 = arith.constant 0.707106769 : f32
    %268 = vector.broadcast %cst_134 : f32 to vector<8x128xf32>
    %269 = arith.mulf %268, %267 : vector<8x128xf32>
    %270 = arith.addf %266, %269 : vector<8x128xf32>
    %271 = arith.mulf %57, %65 : vector<8x128xf32>
    %cst_135 = arith.constant 0.707106769 : f32
    %272 = vector.broadcast %cst_135 : f32 to vector<8x128xf32>
    %273 = arith.mulf %272, %271 : vector<8x128xf32>
    %274 = arith.mulf %59, %63 : vector<8x128xf32>
    %cst_136 = arith.constant 0.707106769 : f32
    %275 = vector.broadcast %cst_136 : f32 to vector<8x128xf32>
    %276 = arith.mulf %275, %274 : vector<8x128xf32>
    %277 = arith.addf %273, %276 : vector<8x128xf32>
    %278 = arith.mulf %57, %63 : vector<8x128xf32>
    %cst_137 = arith.constant -0.408248305 : f32
    %279 = vector.broadcast %cst_137 : f32 to vector<8x128xf32>
    %280 = arith.mulf %279, %278 : vector<8x128xf32>
    %281 = arith.mulf %59, %65 : vector<8x128xf32>
    %cst_138 = arith.constant 0.816496611 : f32
    %282 = vector.broadcast %cst_138 : f32 to vector<8x128xf32>
    %283 = arith.mulf %282, %281 : vector<8x128xf32>
    %284 = arith.addf %280, %283 : vector<8x128xf32>
    %285 = arith.mulf %61, %67 : vector<8x128xf32>
    %cst_139 = arith.constant -0.408248305 : f32
    %286 = vector.broadcast %cst_139 : f32 to vector<8x128xf32>
    %287 = arith.mulf %286, %285 : vector<8x128xf32>
    %288 = arith.addf %284, %287 : vector<8x128xf32>
    %289 = arith.mulf %59, %67 : vector<8x128xf32>
    %cst_140 = arith.constant 0.707106769 : f32
    %290 = vector.broadcast %cst_140 : f32 to vector<8x128xf32>
    %291 = arith.mulf %290, %289 : vector<8x128xf32>
    %292 = arith.mulf %61, %65 : vector<8x128xf32>
    %cst_141 = arith.constant 0.707106769 : f32
    %293 = vector.broadcast %cst_141 : f32 to vector<8x128xf32>
    %294 = arith.mulf %293, %292 : vector<8x128xf32>
    %295 = arith.addf %291, %294 : vector<8x128xf32>
    %cst_142 = arith.constant -0.707106769 : f32
    %296 = vector.broadcast %cst_142 : f32 to vector<8x128xf32>
    %297 = arith.mulf %296, %278 : vector<8x128xf32>
    %cst_143 = arith.constant 0.707106769 : f32
    %298 = vector.broadcast %cst_143 : f32 to vector<8x128xf32>
    %299 = arith.mulf %298, %285 : vector<8x128xf32>
    %300 = arith.addf %297, %299 : vector<8x128xf32>
    %301 = arith.mulf %270, %49 : vector<8x128xf32>
    %c4_144 = arith.constant 4 : index
    %c0_145 = arith.constant 0 : index
    %c0_146 = arith.constant 0 : index
    %302 = vector.load %arg2[%c4_144, %c0_145, %c0_146] : memref<25x8x128xf32, #tpu.memory_space<vmem>>, vector<1x8x128xf32>
    %303 = vector.shape_cast %302 : vector<1x8x128xf32> to vector<8x128xf32>
    %304 = vector.shape_cast %301 : vector<8x128xf32> to vector<1x8x128xf32>
    tpu.vector_store %arg2[%c4_144, %c0_145, %c0_146], %304 {strides = array<i32>} : memref<25x8x128xf32, #tpu.memory_space<vmem>>, vector<1x8x128xf32>,
    %305 = arith.mulf %277, %49 : vector<8x128xf32>
    %c9_147 = arith.constant 9 : index
    %c0_148 = arith.constant 0 : index
    %c0_149 = arith.constant 0 : index
    %306 = vector.load %arg2[%c9_147, %c0_148, %c0_149] : memref<25x8x128xf32, #tpu.memory_space<vmem>>, vector<1x8x128xf32>
    %307 = vector.shape_cast %306 : vector<1x8x128xf32> to vector<8x128xf32>
    %308 = vector.shape_cast %305 : vector<8x128xf32> to vector<1x8x128xf32>
    tpu.vector_store %arg2[%c9_147, %c0_148, %c0_149], %308 {strides = array<i32>} : memref<25x8x128xf32, #tpu.memory_space<vmem>>, vector<1x8x128xf32>,
    %309 = arith.mulf %288, %49 : vector<8x128xf32>
    %c14_150 = arith.constant 14 : index
    %c0_151 = arith.constant 0 : index
    %c0_152 = arith.constant 0 : index
    %310 = vector.load %arg2[%c14_150, %c0_151, %c0_152] : memref<25x8x128xf32, #tpu.memory_space<vmem>>, vector<1x8x128xf32>
    %311 = vector.shape_cast %310 : vector<1x8x128xf32> to vector<8x128xf32>
    %312 = vector.shape_cast %309 : vector<8x128xf32> to vector<1x8x128xf32>
    tpu.vector_store %arg2[%c14_150, %c0_151, %c0_152], %312 {strides = array<i32>} : memref<25x8x128xf32, #tpu.memory_space<vmem>>, vector<1x8x128xf32>,
    %313 = arith.mulf %295, %49 : vector<8x128xf32>
    %c19 = arith.constant 19 : index
    %c0_153 = arith.constant 0 : index
    %c0_154 = arith.constant 0 : index
    %314 = vector.load %arg2[%c19, %c0_153, %c0_154] : memref<25x8x128xf32, #tpu.memory_space<vmem>>, vector<1x8x128xf32>
    %315 = vector.shape_cast %314 : vector<1x8x128xf32> to vector<8x128xf32>
    %316 = vector.shape_cast %313 : vector<8x128xf32> to vector<1x8x128xf32>
    tpu.vector_store %arg2[%c19, %c0_153, %c0_154], %316 {strides = array<i32>} : memref<25x8x128xf32, #tpu.memory_space<vmem>>, vector<1x8x128xf32>,
    %317 = arith.mulf %300, %49 : vector<8x128xf32>
    %c24 = arith.constant 24 : index
    %c0_155 = arith.constant 0 : index
    %c0_156 = arith.constant 0 : index
    %318 = vector.load %arg2[%c24, %c0_155, %c0_156] : memref<25x8x128xf32, #tpu.memory_space<vmem>>, vector<1x8x128xf32>
    %319 = vector.shape_cast %318 : vector<1x8x128xf32> to vector<8x128xf32>
    %320 = vector.shape_cast %317 : vector<8x128xf32> to vector<1x8x128xf32>
    tpu.vector_store %arg2[%c24, %c0_155, %c0_156], %320 {strides = array<i32>} : memref<25x8x128xf32, #tpu.memory_space<vmem>>, vector<1x8x128xf32>,
    return
  }
  func.func @transform_0(%arg0: i32) -> (i32, i32, i32) {
    %c0_i32 = arith.constant 0 : i32
    %c0_i32_0 = arith.constant 0 : i32
    %c0_i32_1 = arith.constant 0 : i32
    return %c0_i32, %arg0, %c0_i32_0 : i32, i32, i32
  }
  func.func @transform_1(%arg0: i32) -> (i32, i32, i32) {
    %c0_i32 = arith.constant 0 : i32
    %c0_i32_0 = arith.constant 0 : i32
    %c0_i32_1 = arith.constant 0 : i32
    return %c0_i32, %arg0, %c0_i32_0 : i32, i32, i32
  }
}

</mosaic_0001>

<llo_original>
// kernel: tpu_custom_call.1
$region0: #{tpu_custom_call.1}
  #allocation0 [shape = 'u32[]', space=smem, size = 0x4, offset = 0x4, fixed_abs, tag = 'smem constant byte address 0x4 - core index']
  #allocation1 [shape = 'u32[144,128]{1,0:T(1,128)}', space=vmem, size = 0x12000, scoped, tag = 'internal scratch']
  %s0 = inlined_call_operand.hbm [shape: f32[18,16,128], index: 0, kind: input, shape index: {}]
  %s1 = inlined_call_operand.hbm [shape: f32[25,16,128], index: 1, kind: output, shape index: {}]
  %s2 = sld [smem:[#allocation0]]
  $region41: #{tpu_custom_call.1} parent=0
    _
  %s4 = ssub.s32 1, %s2
  %s5 = scalar_select 0, %s4, %s2
  $region1: #{tpu_custom_call.1} parent=0
    #allocation2 [shape = 'u8[147456]{0}', space=vmem, size = 0x24000, scoped, tag = 'input window, operand 0']
    #allocation3 [shape = 's32[2]{0}', space=sflag, size = 0x8, scoped, tag = 'scoped memory for tpu_custom_call.1']
    #allocation4 [shape = 's32[2]{0}', space=sflag, size = 0x8, scoped, tag = 'scoped memory for tpu_custom_call.1']
    #allocation5 [shape = 'u8[204800]{0}', space=vmem, size = 0x32000, scoped, tag = 'output window, operand 0']
    %6 = vsyncpa [#allocation3], 0
    %s7 = scalar_lea.sflag [#allocation3], 1
    %8 = vsyncpa %s7, 0
    %9 = vsyncpa [#allocation4], 0
    %s10 = scalar_lea.sflag [#allocation4], 1
    %11 = vsyncpa %s10, 0
    loop: start=0, step=1, limit=4
    $region2: #{tpu_custom_call.1} parent=1 // loop_pre_header
      _
    $region3: #{tpu_custom_call.1} parent=1 // loop_header
      %s13 = sphi 0, %s17
      %p14 = scmp.ge.s32.totalorder %s13, 4
      %s23 = sphi 0, %s25
      %s26 = sphi 0, %s23
      %s27 = sphi 0, %s26
      %s43 = sphi 0, %s27
      %s49 = sphi 0, %s51
      %s52 = sphi 0, %s49
      %s53 = sphi 0, %s52
      %s69 = sphi 0, %s53
    $region4: #{tpu_custom_call.1} parent=1 // loop_header_branch
      %16 = sbr.rel (%p14) target = $region8
    $region5: #{tpu_custom_call.1} parent=1 // loop_body
      %s18 = ssub.s32 %s13, 1
      %s19 = ssub.s32 %s13, 2
      %s20 = sadd.s32 %s13, 1
      %s21 = ssub.s32 %s13, %s20
      %p22 = scmp.eq.s32.totalorder %s21, 0
      %s24 = sadd.s32 %s23, 1
      %s25 = scalar_select %p22, %s23, %s24
      %p28 = pneg %p22
      %p29 = scmp.eq.s32.totalorder %s13, 1
      %p30 = por %p28, %p29
      %p31 = scmp.ne.s32.totalorder %s23, %s26
      %p32 = scmp.eq.s32.totalorder %s13, 0
      %p33 = por %p31, %p32
      %p34 = scmp.ne.s32.totalorder %s23, %s26
      %p35 = scmp.eq.s32.totalorder %s18, 1
      %p36 = por %p34, %p35
      %p37 = scmp.ne.s32.totalorder %s26, %s27
      %p38 = scmp.eq.s32.totalorder %s18, 0
      %p39 = por %p37, %p38
      %p40 = scmp.ne.s32.totalorder %s26, %s27
      %p41 = scmp.eq.s32.totalorder %s19, 1
      %p42 = por %p40, %p41
      %p44 = scmp.ne.s32.totalorder %s27, %s43
      %p45 = scmp.eq.s32.totalorder %s19, 0
      %p46 = por %p44, %p45
      %s47 = ssub.s32 %s13, %s20
      %p48 = scmp.eq.s32.totalorder %s47, 0
      %s50 = sadd.s32 %s49, 1
      %s51 = scalar_select %p48, %s49, %s50
      %p54 = pneg %p48
      %p55 = scmp.eq.s32.totalorder %s13, 1
      %p56 = por %p54, %p55
      %p57 = scmp.ne.s32.totalorder %s49, %s52
      %p58 = scmp.eq.s32.totalorder %s13, 0
      %p59 = por %p57, %p58
      %p60 = scmp.ne.s32.totalorder %s49, %s52
      %p61 = scmp.eq.s32.totalorder %s18, 1
      %p62 = por %p60, %p61
      %p63 = scmp.ne.s32.totalorder %s52, %s53
      %p64 = scmp.eq.s32.totalorder %s18, 0
      %p65 = por %p63, %p64
      %p66 = scmp.ne.s32.totalorder %s52, %s53
      %p67 = scmp.eq.s32.totalorder %s19, 1
      %p68 = por %p66, %p67
      %p70 = scmp.ne.s32.totalorder %s53, %s69
      %p71 = scmp.eq.s32.totalorder %s19, 0
      %p72 = por %p70, %p71
      %p73 = scmp.le.s32.totalorder 1, %s13
      %p74 = scmp.lt.s32.totalorder %s13, 3
      %p75 = pnand %p73, %p74
      %p76 = pneg %p75
      // Predicated region
      $region9: #{tpu_custom_call.1} parent=5 // pred_check
        _
      $region10: #{tpu_custom_call.1} parent=5 // pred_check_branch
        %78 = sbr.rel (%p75) target = $region12
      $region11: #{tpu_custom_call.1} parent=5 // pred_region
        %s79 = ssub.s32 %s13, 1
      $region12: #{tpu_custom_call.1} parent=5 // pred_fallthru
        _
      %p80 = scmp.lt.s32.totalorder %s13, 2
      // Predicated region
      $region13: #{tpu_custom_call.1} parent=5 // pred_check
        %p81 = pneg %p80
      $region14: #{tpu_custom_call.1} parent=5 // pred_check_branch
        %83 = sbr.rel (%p81) target = $region16
      $region15: #{tpu_custom_call.1} parent=5 // pred_region
        // Predicated region
        $region17: #{tpu_custom_call.1} parent=15 // pred_check
          %p84 = pneg %p33
        $region18: #{tpu_custom_call.1} parent=15 // pred_check_branch
          %86 = sbr.rel (%p84) target = $region20
        $region19: #{tpu_custom_call.1} parent=15 // pred_region
          %s87 = sand.u32 %s23, 1
          %s88 = scalar_lea.sflag [#allocation3], %s87
          %s89 = sand.u32 %s23, 1
          %s90 = smul.addr %s89, 144
          %s91 = scalar_lea.vmem [#allocation2], %s90
          %s93 = ssub.s32 2304, 2304
          %94 = vsyncadd %s88, %s93
          %s95 = smul.addr %s13, 128
          %s96 = scalar_lea.hbm %s0, %s95
          %s97 = sshll.u32 %s91, 4
          %s98 = int_to_ptr.vmem [resolvable:$true] %s97
          %103 = dma.hbm_to_vmem [thread:$0]  %s96, 2304, %s98, %s88, 256, 128, 8
        $region20: #{tpu_custom_call.1} parent=15 // pred_fallthru
          _
      $region16: #{tpu_custom_call.1} parent=5 // pred_fallthru
        _
      %p104 = scmp.le.s32.totalorder 1, %s13
      %p105 = scmp.lt.s32.totalorder %s13, 3
      %p106 = pnand %p104, %p105
      %p107 = pneg %p106
      // Predicated region
      $region21: #{tpu_custom_call.1} parent=5 // pred_check
        _
      $region22: #{tpu_custom_call.1} parent=5 // pred_check_branch
        %109 = sbr.rel (%p106) target = $region24
      $region23: #{tpu_custom_call.1} parent=5 // pred_region
        %s110 = ssub.s32 %s13, 1
        %s111 = sand.u32 %s26, 1
        %s112 = scalar_lea.sflag [#allocation3], %s111
        %s113 = sand.u32 %s26, 1
        %s114 = smul.addr %s113, 144
        %s115 = scalar_lea.vmem [#allocation2], %s114
        // Predicated region
        $region25: #{tpu_custom_call.1} parent=23 // pred_check
          %p116 = pneg %p39
        $region26: #{tpu_custom_call.1} parent=23 // pred_check_branch
          %118 = sbr.rel (%p116) target = $region28
        $region27: #{tpu_custom_call.1} parent=23 // pred_region
          %119 = dma.done %s112, 2304
        $region28: #{tpu_custom_call.1} parent=23 // pred_fallthru
          _
        %s120 = sand.u32 %s26, 1
        %s121 = scalar_lea.sflag [#allocation3], %s120
        %s122 = sand.u32 %s26, 1
        %s123 = smul.addr %s122, 144
        %s124 = scalar_lea.vmem [#allocation2], %s123
        %p125 = pneg %p39
        %p126 = pneg %p36
        %p127 = pneg %p65
        %p128 = pneg %p62
        %s129 = sand.u32 %s52, 1
        %s130 = scalar_lea.sflag [#allocation4], %s129
        %s131 = sand.u32 %s52, 1
        %s132 = smul.addr %s131, 200
        %s133 = scalar_lea.vmem [#allocation5], %s132
        %s134 = scalar_lea.vmem %s115, 72 [#allocation2]
        %v135 = vld [vmem:[%s134] sm:$0xff]
        %s136 = scalar_lea.vmem %s115, 80 [#allocation2]
        %v137 = vld [vmem:[%s136] sm:$0xff]
        %s138 = scalar_lea.vmem %s115, 88 [#allocation2]
        %v139 = vld [vmem:[%s138] sm:$0xff]
        %s140 = scalar_lea.vmem %s115, 96 [#allocation2]
        %v141 = vld [vmem:[%s140] sm:$0xff]
        %s142 = scalar_lea.vmem %s115, 104 [#allocation2]
        %v143 = vld [vmem:[%s142] sm:$0xff]
        %s144 = scalar_lea.vmem %s115, 112 [#allocation2]
        %v145 = vld [vmem:[%s144] sm:$0xff]
        %v146 = vmul.f32 %v137, %v145
        %v147 = vmul.f32 %v146, 0.70710677
        %v148 = vmul.f32 %v139, %v143
        %v149 = vmul.f32 %v148, -0.70710677
        %v150 = vadd.f32 %v147, %v149
        %v151 = vmul.f32 %v135, %v145
        %v152 = vmul.f32 %v151, -0.70710677
        %v153 = vmul.f32 %v139, %v141
        %v154 = vmul.f32 %v153, 0.70710677
        %v155 = vadd.f32 %v152, %v154
        %v156 = vmul.f32 %v135, %v143
        %v157 = vmul.f32 %v156, 0.70710677
        %v158 = vmul.f32 %v137, %v141
        %v159 = vmul.f32 %v158, -0.70710677
        %v160 = vadd.f32 %v157, %v159
        %s161 = scalar_lea.vmem %s115, 120 [#allocation2]
        %v162 = vld [vmem:[%s161] sm:$0xff]
        %s163 = scalar_lea.vmem %s115, 128 [#allocation2]
        %v164 = vld [vmem:[%s163] sm:$0xff]
        %s165 = scalar_lea.vmem %s115, 136 [#allocation2]
        %v166 = vld [vmem:[%s165] sm:$0xff]
        %v167 = vmul.f32 %v150, %v162
        %v168 = vmul.f32 %v167, -0.57735026
        %v169 = vmul.f32 %v155, %v164
        %v170 = vmul.f32 %v169, -0.57735026
        %v171 = vadd.f32 %v168, %v170
        %v172 = vmul.f32 %v160, %v166
        %v173 = vmul.f32 %v172, -0.57735026
        %v174 = vadd.f32 %v171, %v173
        %v175 = vld [vmem:[%s115] sm:$0xff]
        %s176 = scalar_lea.vmem %s115, 8 [#allocation2]
        %v177 = vld [vmem:[%s176] sm:$0xff]
        %s178 = scalar_lea.vmem %s115, 16 [#allocation2]
        %v179 = vld [vmem:[%s178] sm:$0xff]
        %s180 = scalar_lea.vmem %s115, 24 [#allocation2]
        %v181 = vld [vmem:[%s180] sm:$0xff]
        %s182 = scalar_lea.vmem %s115, 32 [#allocation2]
        %v183 = vld [vmem:[%s182] sm:$0xff]
        %s184 = scalar_lea.vmem %s115, 40 [#allocation2]
        %v185 = vld [vmem:[%s184] sm:$0xff]
        %s186 = scalar_lea.vmem %s115, 48 [#allocation2]
        %v187 = vld [vmem:[%s186] sm:$0xff]
        %s188 = scalar_lea.vmem %s115, 56 [#allocation2]
        %v189 = vld [vmem:[%s188] sm:$0xff]
        %s190 = scalar_lea.vmem %s115, 64 [#allocation2]
        %v191 = vld [vmem:[%s190] sm:$0xff]
        %v192 = vmul.f32 %v179, %v179
        %v193 = vmul.f32 %v175, %v175
        %v194 = vmul.f32 %v177, %v177
        %v195 = vmul.f32 %v179, %v175
        %v196 = vmul.f32 %v195, 1.0925485
        %v197 = vmul.f32 %v175, %v177
        %v198 = vmul.f32 %v197, 1.0925485
        %v199 = vmul.f32 %v194, 2.0
        %v200 = vsub.f32 %v199, %v192
        %v201 = vsub.f32 %v200, %v193
        %v202 = vmul.f32 %v201, 0.31539157
        %v203 = vmul.f32 %v179, %v177
        %v204 = vmul.f32 %v203, 1.0925485
        %v205 = vsub.f32 %v192, %v193
        %v206 = vmul.f32 %v205, 0.54627424
        %v207 = vmul.f32 %v196, %v174
        %208 = vst [vmem:[%s133] sm:$0xff] %v207
        %v209 = vmul.f32 %v198, %v174
        %s210 = scalar_lea.vmem %s133, 40 [#allocation5]
        %211 = vst [vmem:[%s210] sm:$0xff] %v209
        %v212 = vmul.f32 %v202, %v174
        %s213 = scalar_lea.vmem %s133, 80 [#allocation5]
        %214 = vst [vmem:[%s213] sm:$0xff] %v212
        %v215 = vmul.f32 %v204, %v174
        %s216 = scalar_lea.vmem %s133, 120 [#allocation5]
        %217 = vst [vmem:[%s216] sm:$0xff] %v215
        %v218 = vmul.f32 %v206, %v174
        %s219 = scalar_lea.vmem %s133, 160 [#allocation5]
        %220 = vst [vmem:[%s219] sm:$0xff] %v218
        %v221 = vmul.f32 %v185, %v185
        %v222 = vmul.f32 %v181, %v181
        %v223 = vmul.f32 %v183, %v183
        %v224 = vmul.f32 %v185, %v181
        %v225 = vmul.f32 %v224, 1.0925485
        %v226 = vmul.f32 %v181, %v183
        %v227 = vmul.f32 %v226, 1.0925485
        %v228 = vmul.f32 %v223, 2.0
        %v229 = vsub.f32 %v228, %v221
        %v230 = vsub.f32 %v229, %v222
        %v231 = vmul.f32 %v230, 0.31539157
        %v232 = vmul.f32 %v185, %v183
        %v233 = vmul.f32 %v232, 1.0925485
        %v234 = vsub.f32 %v221, %v222
        %v235 = vmul.f32 %v234, 0.54627424
        %v236 = vmul.f32 %v225, %v174
        %s237 = scalar_lea.vmem %s133, 8 [#allocation5]
        %238 = vst [vmem:[%s237] sm:$0xff] %v236
        %v239 = vmul.f32 %v227, %v174
        %s240 = scalar_lea.vmem %s133, 48 [#allocation5]
        %241 = vst [vmem:[%s240] sm:$0xff] %v239
        %v242 = vmul.f32 %v231, %v174
        %s243 = scalar_lea.vmem %s133, 88 [#allocation5]
        %244 = vst [vmem:[%s243] sm:$0xff] %v242
        %v245 = vmul.f32 %v233, %v174
        %s246 = scalar_lea.vmem %s133, 128 [#allocation5]
        %247 = vst [vmem:[%s246] sm:$0xff] %v245
        %v248 = vmul.f32 %v235, %v174
        %s249 = scalar_lea.vmem %s133, 168 [#allocation5]
        %250 = vst [vmem:[%s249] sm:$0xff] %v248
        %v251 = vmul.f32 %v175, %v185
        %v252 = vmul.f32 %v251, 0.70710677
        %v253 = vmul.f32 %v179, %v181
        %v254 = vmul.f32 %v253, 0.70710677
        %v255 = vadd.f32 %v252, %v254
        %v256 = vmul.f32 %v175, %v183
        %v257 = vmul.f32 %v256, 0.70710677
        %v258 = vmul.f32 %v177, %v181
        %v259 = vmul.f32 %v258, 0.70710677
        %v260 = vadd.f32 %v257, %v259
        %v261 = vmul.f32 %v175, %v181
        %v262 = vmul.f32 %v261, -0.4082483
        %v263 = vmul.f32 %v177, %v183
        %v264 = vmul.f32 %v263, 0.8164966
        %v265 = vadd.f32 %v262, %v264
        %v266 = vmul.f32 %v179, %v185
        %v267 = vmul.f32 %v266, -0.4082483
        %v268 = vadd.f32 %v265, %v267
        %v269 = vmul.f32 %v177, %v185
        %v270 = vmul.f32 %v269, 0.70710677
        %v271 = vmul.f32 %v179, %v183
        %v272 = vmul.f32 %v271, 0.70710677
        %v273 = vadd.f32 %v270, %v272
        %v274 = vmul.f32 %v261, -0.70710677
        %v275 = vmul.f32 %v266, 0.70710677
        %v276 = vadd.f32 %v274, %v275
        %v277 = vmul.f32 %v255, %v174
        %s278 = scalar_lea.vmem %s133, 16 [#allocation5]
        %279 = vst [vmem:[%s278] sm:$0xff] %v277
        %v280 = vmul.f32 %v260, %v174
        %s281 = scalar_lea.vmem %s133, 56 [#allocation5]
        %282 = vst [vmem:[%s281] sm:$0xff] %v280
        %v283 = vmul.f32 %v268, %v174
        %s284 = scalar_lea.vmem %s133, 96 [#allocation5]
        %285 = vst [vmem:[%s284] sm:$0xff] %v283
        %v286 = vmul.f32 %v273, %v174
        %s287 = scalar_lea.vmem %s133, 136 [#allocation5]
        %288 = vst [vmem:[%s287] sm:$0xff] %v286
        %v289 = vmul.f32 %v276, %v174
        %s290 = scalar_lea.vmem %s133, 176 [#allocation5]
        %291 = vst [vmem:[%s290] sm:$0xff] %v289
        %v292 = vmul.f32 %v175, %v191
        %v293 = vmul.f32 %v292, 0.70710677
        %v294 = vmul.f32 %v179, %v187
        %v295 = vmul.f32 %v294, 0.70710677
        %v296 = vadd.f32 %v293, %v295
        %v297 = vmul.f32 %v175, %v189
        %v298 = vmul.f32 %v297, 0.70710677
        %v299 = vmul.f32 %v177, %v187
        %v300 = vmul.f32 %v299, 0.70710677
        %v301 = vadd.f32 %v298, %v300
        %v302 = vmul.f32 %v175, %v187
        %v303 = vmul.f32 %v302, -0.4082483
        %v304 = vmul.f32 %v177, %v189
        %v305 = vmul.f32 %v304, 0.8164966
        %v306 = vadd.f32 %v303, %v305
        %v307 = vmul.f32 %v179, %v191
        %v308 = vmul.f32 %v307, -0.4082483
        %v309 = vadd.f32 %v306, %v308
        %v310 = vmul.f32 %v177, %v191
        %v311 = vmul.f32 %v310, 0.70710677
        %v312 = vmul.f32 %v179, %v189
        %v313 = vmul.f32 %v312, 0.70710677
        %v314 = vadd.f32 %v311, %v313
        %v315 = vmul.f32 %v302, -0.70710677
        %v316 = vmul.f32 %v307, 0.70710677
        %v317 = vadd.f32 %v315, %v316
        %v318 = vmul.f32 %v296, %v174
        %s319 = scalar_lea.vmem %s133, 24 [#allocation5]
        %320 = vst [vmem:[%s319] sm:$0xff] %v318
        %v321 = vmul.f32 %v301, %v174
        %s322 = scalar_lea.vmem %s133, 64 [#allocation5]
        %323 = vst [vmem:[%s322] sm:$0xff] %v321
        %v324 = vmul.f32 %v309, %v174
        %s325 = scalar_lea.vmem %s133, 104 [#allocation5]
        %326 = vst [vmem:[%s325] sm:$0xff] %v324
        %v327 = vmul.f32 %v314, %v174
        %s328 = scalar_lea.vmem %s133, 144 [#allocation5]
        %329 = vst [vmem:[%s328] sm:$0xff] %v327
        %v330 = vmul.f32 %v317, %v174
        %s331 = scalar_lea.vmem %s133, 184 [#allocation5]
        %332 = vst [vmem:[%s331] sm:$0xff] %v330
        %v333 = vmul.f32 %v181, %v191
        %v334 = vmul.f32 %v333, 0.70710677
        %v335 = vmul.f32 %v185, %v187
        %v336 = vmul.f32 %v335, 0.70710677
        %v337 = vadd.f32 %v334, %v336
        %v338 = vmul.f32 %v181, %v189
        %v339 = vmul.f32 %v338, 0.70710677
        %v340 = vmul.f32 %v183, %v187
        %v341 = vmul.f32 %v340, 0.70710677
        %v342 = vadd.f32 %v339, %v341
        %v343 = vmul.f32 %v181, %v187
        %v344 = vmul.f32 %v343, -0.4082483
        %v345 = vmul.f32 %v183, %v189
        %v346 = vmul.f32 %v345, 0.8164966
        %v347 = vadd.f32 %v344, %v346
        %v348 = vmul.f32 %v185, %v191
        %v349 = vmul.f32 %v348, -0.4082483
        %v350 = vadd.f32 %v347, %v349
        %v351 = vmul.f32 %v183, %v191
        %v352 = vmul.f32 %v351, 0.70710677
        %v353 = vmul.f32 %v185, %v189
        %v354 = vmul.f32 %v353, 0.70710677
        %v355 = vadd.f32 %v352, %v354
        %v356 = vmul.f32 %v343, -0.70710677
        %v357 = vmul.f32 %v348, 0.70710677
        %v358 = vadd.f32 %v356, %v357
        %v359 = vmul.f32 %v337, %v174
        %s360 = scalar_lea.vmem %s133, 32 [#allocation5]
        %361 = vst [vmem:[%s360] sm:$0xff] %v359
        %v362 = vmul.f32 %v342, %v174
        %s363 = scalar_lea.vmem %s133, 72 [#allocation5]
        %364 = vst [vmem:[%s363] sm:$0xff] %v362
        %v365 = vmul.f32 %v350, %v174
        %s366 = scalar_lea.vmem %s133, 112 [#allocation5]
        %367 = vst [vmem:[%s366] sm:$0xff] %v365
        %v368 = vmul.f32 %v355, %v174
        %s369 = scalar_lea.vmem %s133, 152 [#allocation5]
        %370 = vst [vmem:[%s369] sm:$0xff] %v368
        %v371 = vmul.f32 %v358, %v174
        %s372 = scalar_lea.vmem %s133, 192 [#allocation5]
        %373 = vst [vmem:[%s372] sm:$0xff] %v371
        %s374 = sand.u32 %s52, 1
        %s375 = scalar_lea.sflag [#allocation4], %s374
        %s376 = sand.u32 %s52, 1
        %s377 = smul.addr %s376, 200
        %s378 = scalar_lea.vmem [#allocation5], %s377
        // Predicated region
        $region29: #{tpu_custom_call.1} parent=23 // pred_check
          %p379 = pneg %p62
        $region30: #{tpu_custom_call.1} parent=23 // pred_check_branch
          %381 = sbr.rel (%p379) target = $region32
        $region31: #{tpu_custom_call.1} parent=23 // pred_region
          %s383 = ssub.s32 3200, 3200
          %384 = vsyncadd %s375, %s383
          %s385 = smul.addr %s18, 128
          %s386 = scalar_lea.hbm %s1, %s385
          %s387 = sshll.u32 %s378, 4
          %s388 = int_to_ptr.vmem [resolvable:$true] %s387
          %393 = dma.vmem_to_hbm [thread:$0]  %s388, 3200, %s386, %s375, 128, 256, 8
        $region32: #{tpu_custom_call.1} parent=23 // pred_fallthru
          _
      $region24: #{tpu_custom_call.1} parent=5 // pred_fallthru
        _
      %p394 = scmp.le.s32.totalorder 2, %s13
      // Predicated region
      $region33: #{tpu_custom_call.1} parent=5 // pred_check
        %p395 = pneg %p394
      $region34: #{tpu_custom_call.1} parent=5 // pred_check_branch
        %397 = sbr.rel (%p395) target = $region36
      $region35: #{tpu_custom_call.1} parent=5 // pred_region
        %s398 = ssub.s32 %s13, 2
        // Predicated region
        $region37: #{tpu_custom_call.1} parent=35 // pred_check
          %p399 = pneg %p68
        $region38: #{tpu_custom_call.1} parent=35 // pred_check_branch
          %401 = sbr.rel (%p399) target = $region40
        $region39: #{tpu_custom_call.1} parent=35 // pred_region
          %s402 = sand.u32 %s53, 1
          %s403 = scalar_lea.sflag [#allocation4], %s402
          %s404 = sand.u32 %s53, 1
          %s405 = smul.addr %s404, 200
          %s406 = scalar_lea.vmem [#allocation5], %s405
          %407 = dma.done %s403, 3200
        $region40: #{tpu_custom_call.1} parent=35 // pred_fallthru
          _
      $region36: #{tpu_custom_call.1} parent=5 // pred_fallthru
        _
    $region6: #{tpu_custom_call.1} parent=1 // loop_footer
      %s17 = sadd.s32 1, %s13
    $region7: #{tpu_custom_call.1} parent=1 // loop_footer_branch
      %12 = sbr.rel target = $region3
    $region8: #{tpu_custom_call.1} parent=1 // loop_exit
      _
    %408 = vsyncpa [#allocation3], 1
    %s409 = scalar_lea.sflag [#allocation3], 1
    %410 = vsyncpa %s409, 1
    %411 = vsyncpa [#allocation4], 1
    %s412 = scalar_lea.sflag [#allocation4], 1
    %413 = vsyncpa %s412, 1

</llo_original>
